<compile_context>
chip_gen: v7x
topology: tpu7x:2x2x1
jax: 0.10.0
libtpu: 0.0.40
codegen_flags: <defaults>
</compile_context>

<pallas_src>
import functools

import jax
import jax.numpy as jnp
from jax.experimental import pallas as pl
from jax.experimental.pallas import tpu as pltpu

_F32 = jnp.float32
_BF16 = jnp.bfloat16
_RANK_MAX_TILE = 512

_LIMITS = None


def _tpu_limits():
    """(vmem_limit_bytes, max_row_tile) chosen per TPU generation."""
    global _LIMITS
    if _LIMITS is None:
        try:
            vmem = int(pltpu.get_tpu_info().vmem_capacity_bytes)
        except Exception:
            vmem = 64 * 1024 * 1024
        if vmem >= 128 * 1024 * 1024:               # v5e / v6e
            _LIMITS = (96 * 1024 * 1024, 512)
        else:                                        # v7x (64 MiB) / unknown
            _LIMITS = (48 * 1024 * 1024, 256)
    return _LIMITS


def _row_tile_and_pad(n, max_tile):
    """Pick a row tile (<= max_tile) and the padded row count it divides."""
    if n <= max_tile:
        return n, n                                  # one full-extent block
    for t in range(max_tile, 15, -16):               # mult-of-16 divisor (bf16 safe)
        if n % t == 0:
            return t, n
    n_pad = ((n + max_tile - 1) // max_tile) * max_tile
    return max_tile, n_pad                           # pad rows, mask in kernel


def _pi_row_tile_and_pad(n, m, max_tile, vmem_limit):
    """Pi-pipeline row tile, capped so ~7 live (tm, M) f32 buffers fit VMEM."""
    budget = (3 * vmem_limit) // 4
    cap = budget // (7 * 4 * max(m, 1))
    cap = max(16 * (cap // 16), 16)
    return _row_tile_and_pad(n, min(max_tile, cap))


def _sqdist_from_bt(a, b_t, use_mxu):
    """a: (R, D), b_t: (D, M)  ->  (R, M) squared euclidean distance."""
    if use_mxu:
        aa = jnp.sum(a * a, axis=-1, keepdims=True)          # (R, 1)
        bb = jnp.sum(b_t * b_t, axis=0, keepdims=True)        # (1, M)
        ab = jnp.dot(a, b_t, preferred_element_type=_F32)     # MXU
        return aa + bb - 2.0 * ab
    # D is tiny (verts, D=3): stay on the VPU, never touch the MXU.
    acc = jnp.zeros((a.shape[0], b_t.shape[1]), _F32)
    for c in range(a.shape[1]):
        diff = a[:, c:c + 1] - b_t[c:c + 1, :]
        acc = acc + diff * diff
    return acc


# ---------------------------------------------------------------------------
# kernel 1: fused knn (sqdist + iterative k-argmin, no HBM round trip)
# ---------------------------------------------------------------------------
def _knn_kernel(a_ref, bt_ref, idx_ref, *, k, use_mxu):
    a = a_ref[0]                                      # (tm, D)
    b_t = bt_ref[0]                                   # (D, M)
    sq = _sqdist_from_bt(a, b_t, use_mxu)             # (tm, M)
    tm, m = sq.shape
    col_ids = jax.lax.broadcasted_iota(jnp.int32, (tm, m), 1)
    k_ids = jax.lax.broadcasted_iota(jnp.int32, (tm, k), 1)
    idx_out = jnp.zeros((tm, k), jnp.int32)
    work = sq
    for kk in range(k):
        mv = jnp.min(work, axis=-1, keepdims=True)                    # (tm, 1)
        sel = jnp.min(jnp.where(work == mv, col_ids, m),
                      axis=-1, keepdims=True)                         # argmin
        sel = jnp.minimum(sel, m - 1)                 # guard degenerate k >= M
        idx_out = jnp.where(k_ids == kk, sel, idx_out)
        work = jnp.where(col_ids == sel, jnp.inf, work)
    idx_ref[0] = idx_out


def knn_indices(a, b, k, *, max_tile, vmem_limit):
    """k nearest neighbours of each a-row among b-rows (squared-dist order)."""
    B, Na, D = a.shape
    M = b.shape[1]
    tm, n_pad = _row_tile_and_pad(Na, max_tile)
    a32 = a.astype(_F32)
    if n_pad != Na:
        a32 = jnp.pad(a32, ((0, 0), (0, n_pad - Na), (0, 0)))
    b_t = jnp.swapaxes(b.astype(_F32), 1, 2)          # (B, D, M)
    kern = functools.partial(_knn_kernel, k=int(k), use_mxu=D > 4)
    idx = pl.pallas_call(
        kern,
        out_shape=jax.ShapeDtypeStruct((B, n_pad, k), jnp.int32),
        grid=(B, n_pad // tm),
        in_specs=[pl.BlockSpec((1, tm, D), lambda b_, i: (b_, i, 0)),
                  pl.BlockSpec((1, D, M), lambda b_, i: (b_, 0, 0))],
        out_specs=pl.BlockSpec((1, tm, k), lambda b_, i: (b_, i, 0)),
        compiler_params=pltpu.CompilerParams(
            dimension_semantics=("parallel", "parallel"),
            vmem_limit_bytes=vmem_limit),
    )(a32, b_t)
    return idx[:, :Na]


# ---------------------------------------------------------------------------
# kernel 2: fused Pi pipeline (cdist -> softmax -> top-10 -> packed matmul)
# ---------------------------------------------------------------------------
def _pi_pipeline_kernel(fa_ref, fbt_ref, rhs_ref, pi_ref, prod_ref, *,
                        alpha, topk, use_mxu, n_valid):
    fa = fa_ref[0]                                    # (tm, D)
    fb_t = fbt_ref[0]                                 # (D, M)
    sq = jnp.maximum(_sqdist_from_bt(fa, fb_t, use_mxu), 0.0)
    logits = (-alpha) * jnp.sqrt(sq)                  # torch.cdist semantics
    logits = logits - jnp.max(logits, axis=-1, keepdims=True)
    e = jnp.exp(logits)
    pi = e * pl.reciprocal(jnp.sum(e, axis=-1, keepdims=True), approx=True)

    # top-k sparsification (torch.topk + scatter): one XLU max per iteration,
    # pi_sparse accumulated directly (no col-id iota / argmin / keep mask).
    # Exact ties keep every tied column; only matters for degenerate rows.
    work = pi
    pi_sparse = jnp.zeros_like(pi)
    for _ in range(topk):
        mv = jnp.max(work, axis=-1, keepdims=True)
        hit = work == mv
        pi_sparse = jnp.where(hit, pi, pi_sparse)
        work = jnp.where(hit, -jnp.inf, work)

    if n_valid is not None:                           # zero padded rows (static)
        tm = fa.shape[0]
        row_ids = pl.program_id(1) * tm + jax.lax.broadcasted_iota(
            jnp.int32, (tm, 1), 0)
        pi_sparse = jnp.where(row_ids < n_valid, pi_sparse, 0.0)

    pi_ref[0] = pi_sparse.astype(pi_ref.dtype)        # bf16 HBM store
    # packed RHS: one MXU pass yields [Pi @ verts | Pi @ verts_neighbours]
    prod_ref[0] = jnp.dot(pi_sparse, rhs_ref[0], preferred_element_type=_F32)


def pi_pipeline(feat_a, feat_b, rhs, alpha, *, topk, max_tile, vmem_limit):
    """Returns (Pi bf16, row-padded & padded rows zeroed; prod f32 sliced)."""
    B, Na, D = feat_a.shape
    M = feat_b.shape[1]
    R = rhs.shape[2]
    tm, n_pad = _pi_row_tile_and_pad(Na, M, max_tile, vmem_limit)
    fa = feat_a.astype(_F32)
    if n_pad != Na:
        fa = jnp.pad(fa, ((0, 0), (0, n_pad - Na), (0, 0)))
    fb_t = jnp.swapaxes(feat_b.astype(_F32), 1, 2)    # (B, D, M)
    kern = functools.partial(
        _pi_pipeline_kernel, alpha=float(alpha), topk=int(min(topk, M)),
        use_mxu=D > 4, n_valid=(Na if n_pad != Na else None))
    pi, prod = pl.pallas_call(
        kern,
        out_shape=(jax.ShapeDtypeStruct((B, n_pad, M), _BF16),
                   jax.ShapeDtypeStruct((B, n_pad, R), _F32)),
        grid=(B, n_pad // tm),
        in_specs=[pl.BlockSpec((1, tm, D), lambda b_, i: (b_, i, 0)),
                  pl.BlockSpec((1, D, M), lambda b_, i: (b_, 0, 0)),
                  pl.BlockSpec((1, M, R), lambda b_, i: (b_, 0, 0))],
        out_specs=(pl.BlockSpec((1, tm, M), lambda b_, i: (b_, i, 0)),
                   pl.BlockSpec((1, tm, R), lambda b_, i: (b_, i, 0))),
        compiler_params=pltpu.CompilerParams(
            dimension_semantics=("parallel", "parallel"),
            vmem_limit_bytes=vmem_limit),
    )(fa, fb_t, rhs.astype(_F32))
    return pi, prod[:, :Na]


# ---------------------------------------------------------------------------
# kernel 3: chamfer (squared, like chamfer_3DDist), fully reduced in-kernel
# ---------------------------------------------------------------------------
def _chamfer_kernel(p1_ref, p2t_ref, d1_ref, d2_ref, rsum_ref, cmin_ref, *,
                    use_mxu, n_valid):
    i = pl.program_id(1)
    sq = jnp.maximum(_sqdist_from_bt(p1_ref[0], p2t_ref[0], use_mxu), 0.0)

    @pl.when(i == 0)
    def _():
        rsum_ref[...] = jnp.zeros_like(rsum_ref)
        cmin_ref[...] = jnp.full(cmin_ref.shape, jnp.inf, _F32)

    if n_valid is not None:                           # mask padded rows (static)
        tm = sq.shape[0]
        row_ids = i * tm + jax.lax.broadcasted_iota(jnp.int32, (tm, 1), 0)
        valid = row_ids < n_valid
        row_min = jnp.where(valid, jnp.min(sq, axis=-1, keepdims=True), 0.0)
        col_sq = jnp.where(valid, sq, jnp.inf)
    else:
        row_min = jnp.min(sq, axis=-1, keepdims=True)
        col_sq = sq

    # vector-side accumulators (no per-step scalar round trip)
    rsum_ref[...] = rsum_ref[...] + row_min
    cmin_ref[...] = jnp.minimum(cmin_ref[...],
                                jnp.min(col_sq, axis=0, keepdims=True))

    @pl.when(i == pl.num_programs(1) - 1)
    def _():
        d1_ref[...] = jnp.full(d1_ref.shape, jnp.sum(rsum_ref[...]), _F32)
        d2_ref[...] = jnp.full(d2_ref.shape, jnp.sum(cmin_ref[...]), _F32)


def chamfer_loss(p1, p2, *, max_tile, vmem_limit):
    """mean_i(min_j |p1_i - p2_j|^2) + mean_j(min_i |...|^2)  (chamfer_3DDist)."""
    B, Np, C = p1.shape
    M = p2.shape[1]
    tm, n_pad = _row_tile_and_pad(Np, max_tile)
    p1f = p1.astype(_F32)
    if n_pad != Np:
        p1f = jnp.pad(p1f, ((0, 0), (0, n_pad - Np), (0, 0)))
    p2_t = jnp.swapaxes(p2.astype(_F32), 1, 2)        # (B, C, M)
    d1s, d2s = pl.pallas_call(
        functools.partial(_chamfer_kernel, use_mxu=C > 4,
                          n_valid=(Np if n_pad != Np else None)),
        out_shape=(jax.ShapeDtypeStruct((B, 1, 1), _F32),
                   jax.ShapeDtypeStruct((B, 1, 1), _F32)),
        grid=(B, n_pad // tm),
        in_specs=[pl.BlockSpec((1, tm, C), lambda b_, i: (b_, i, 0)),
                  pl.BlockSpec((1, C, M), lambda b_, i: (b_, 0, 0))],
        out_specs=(pl.BlockSpec((1, 1, 1), lambda b_, i: (b_, 0, 0)),
                   pl.BlockSpec((1, 1, 1), lambda b_, i: (b_, 0, 0))),
        scratch_shapes=[pltpu.VMEM((tm, 1), _F32),
                        pltpu.VMEM((1, M), _F32)],
        compiler_params=pltpu.CompilerParams(
            dimension_semantics=("parallel", "arbitrary"),
            vmem_limit_bytes=vmem_limit),
    )(p1f, p2_t)
    return jnp.sum(d1s) / (B * Np) + jnp.sum(d2s) / (B * M)


# ---------------------------------------------------------------------------
# kernel 4: fused rank loss ||Pi Pi^T - I||_F  (triangular grid, bf16 MXU)
# ---------------------------------------------------------------------------
def _rank_kernel(i_tbl_ref, j_tbl_ref, pa_ref, pb_ref, out_ref, acc_ref, *,
                 n_valid, tile, masked):
    s = pl.program_id(1)
    bi = i_tbl_ref[s]
    bj = j_tbl_ref[s]

    @pl.when(s == 0)
    def _():
        acc_ref[...] = jnp.zeros_like(acc_ref)

    a = pa_ref[0]                                     # (t, M) bf16
    b = pb_ref[0]                                     # (t, M) bf16
    # Pi_i @ Pi_j^T on the MXU (bf16 in, f32 accumulate).
    g = jax.lax.dot_general(a, b, (((1,), (1,)), ((), ())),
                            preferred_element_type=_F32)          # (t, t)
    t = tile
    row_g = bi * t + jax.lax.broadcasted_iota(jnp.int32, (t, t), 0)
    col_g = bj * t + jax.lax.broadcasted_iota(jnp.int32, (t, t), 1)
    eye = row_g == col_g
    if masked:                                        # padded rows carry no I
        eye = jnp.logical_and(eye, row_g < n_valid)
    diff = g - eye.astype(_F32)
    w = jnp.where(bi == bj, 1.0, 2.0)                 # Gram-symmetry weight
    # keep the accumulator vector-side; reduce to a scalar only at the end
    acc_ref[...] = acc_ref[...] + w * jnp.sum(diff * diff, axis=-1, keepdims=True)

    @pl.when(s == pl.num_programs(1) - 1)
    def _():
        out_ref[...] = jnp.full(out_ref.shape, jnp.sum(acc_ref[...]), _F32)


def _rank_tile(n_pad):
    if n_pad <= _RANK_MAX_TILE:
        return n_pad
    for t in range(_RANK_MAX_TILE, 15, -16):
        if n_pad % t == 0:
            return t
    for t in range(_RANK_MAX_TILE, 7, -8):            # fallback
        if n_pad % t == 0:
            return t
    return n_pad


def rank_frobenius_norms(pi, n_valid, *, vmem_limit):
    """||Pi Pi^T - I||_F per batch; pi may be row-padded (padded rows zero)."""
    B, Np_pad, M = pi.shape
    t = _rank_tile(Np_pad)
    nt = Np_pad // t
    pairs_i, pairs_j = [], []
    for i in range(nt):
        for j in range(i, nt):                        # triangular: j >= i only
            pairs_i.append(i)
            pairs_j.append(j)
    i_tbl = jnp.asarray(pairs_i, jnp.int32)
    j_tbl = jnp.asarray(pairs_j, jnp.int32)
    ntri = len(pairs_i)
    kern = functools.partial(_rank_kernel, n_valid=int(n_valid), tile=int(t),
                             masked=Np_pad != n_valid)
    out = pl.pallas_call(
        kern,
        out_shape=jax.ShapeDtypeStruct((B, 1, 1), _F32),
        grid_spec=pltpu.PrefetchScalarGridSpec(
            num_scalar_prefetch=2,
            grid=(B, ntri),
            in_specs=[pl.BlockSpec((1, t, M), lambda b_, s, it, jt: (b_, it[s], 0)),
                      pl.BlockSpec((1, t, M), lambda b_, s, it, jt: (b_, jt[s], 0))],
            out_specs=pl.BlockSpec((1, 1, 1), lambda b_, s, it, jt: (b_, 0, 0)),
            scratch_shapes=[pltpu.VMEM((t, 1), _F32)]),
        compiler_params=pltpu.CompilerParams(
            dimension_semantics=("parallel", "arbitrary"),
            vmem_limit_bytes=vmem_limit),
    )(i_tbl, j_tbl, pi, pi)
    return jnp.sqrt(out[:, 0, 0])                     # (B,)


# ---------------------------------------------------------------------------
# dist branch (tiny: N_dist=8 query rows) -- plain JAX, launch overhead > work
# ---------------------------------------------------------------------------
def _dist_branch(feat, dist, rand, k, b_idx):
    f1 = feat[:, rand]                                # (B, Nd, D)
    d2 = (jnp.sum(f1 * f1, -1, keepdims=True)
          - 2.0 * jnp.einsum('bnd,bmd->bnm', f1, feat)
          + jnp.sum(feat * feat, -1)[:, None, :])
    idx = jax.lax.top_k(-d2, k)[1]                    # k nearest (B, Nd, k)
    f_nbr = feat[b_idx, idx]                          # (B, Nd, k, D)
    dr = jnp.sqrt(jnp.maximum(jnp.sum((f_nbr - f1[:, :, None, :]) ** 2, -1), 0.0))
    dg = dist[b_idx, idx, rand[None, :, None]]        # dist[b, knn_idx, rand]
    num = jnp.sum(dr * dg, axis=-1)
    na = jnp.maximum(jnp.sqrt(jnp.sum(dr * dr, -1)), 1e-8)
    nb = jnp.maximum(jnp.sqrt(jnp.sum(dg * dg, -1)), 1e-8)
    return jnp.sum(1.0 - jnp.abs(num / (na * nb)))


# ---------------------------------------------------------------------------
# forward pass
# ---------------------------------------------------------------------------
def graph_deform_loss_neural_forward(
        feat1, feat2, dist1, dist2, verts1, verts2, alpha_i,
        *, k_dist=4, N_dist=8, k_deform=4,
        w_dist=1.0, w_map=1.0, w_deform=1.0, w_self_rec=1.0,
        w_cd=1.0, w_arap=1.0, w_rank=1.0,
        sample_key=None):
    vmem_limit, max_tile = _tpu_limits()

    feat1 = feat1.astype(_F32)
    feat2 = feat2.astype(_F32)
    verts1 = verts1.astype(_F32)
    verts2 = verts2.astype(_F32)
    dist1 = dist1.astype(_F32)
    dist2 = dist2.astype(_F32)

    B, num1, _ = feat1.shape
    num2 = feat2.shape[1]
    N1 = verts1.shape[1]
    N2 = verts2.shape[1]
    N = N1
    b_idx = jnp.arange(B)[:, None, None]

    # ------------------ dist loss ---------------------------------------------
    key = jax.random.PRNGKey(1) if sample_key is None else sample_key
    k1, k2 = jax.random.split(key)
    # TODO(synk): random.sample in the reference -> deterministic permutation.
    rand1 = jax.random.permutation(k1, num1)[:N_dist]
    rand2 = jax.random.permutation(k2, num2)[:N_dist]
    dist_loss = (_dist_branch(feat1, dist1, rand1, k_dist, b_idx)
                 + _dist_branch(feat2, dist2, rand2, k_dist, b_idx)) * w_dist

    # ------------------ neighbour sets on the vertex clouds -------------------
    idx11 = knn_indices(verts1, verts1, k_deform,
                        max_tile=max_tile, vmem_limit=vmem_limit)   # (B, N1, k)
    idx22 = knn_indices(verts2, verts2, k_deform,
                        max_tile=max_tile, vmem_limit=vmem_limit)   # (B, N2, k)
    verts1_nbr = verts1[b_idx, idx11]                 # (B, N1, k, 3)
    verts2_nbr = verts2[b_idx, idx22]                 # (B, N2, k, 3)

    # ------------------ fused Pi pipeline --------------------------------------
    rhs12 = jnp.concatenate([verts2, verts2_nbr.reshape(B, N2, k_deform * 3)], -1)
    rhs21 = jnp.concatenate([verts1, verts1_nbr.reshape(B, N1, k_deform * 3)], -1)
    Pi12_pad, prod12 = pi_pipeline(feat1, feat2, rhs12, alpha_i, topk=10,
                                   max_tile=max_tile, vmem_limit=vmem_limit)
    Pi21_pad, prod21 = pi_pipeline(feat2, feat1, rhs21, alpha_i, topk=10,
                                   max_tile=max_tile, vmem_limit=vmem_limit)

    verts12 = prod12[..., :3]                         # Pi_12 @ verts2  (B, N1, 3)
    verts21 = prod21[..., :3]                         # Pi_21 @ verts1  (B, N2, 3)
    nbr_corr12 = prod12[..., 3:].reshape(B, N1, k_deform, 3)
    nbr_corr21 = prod21[..., 3:].reshape(B, N2, k_deform, 3)

    # ------------------ map loss (FrobeniusLoss on 4-D tensors, plain JAX) -----
    corr_nbr12 = verts12[b_idx, idx11]                # (B, N1, k, 3)
    corr_nbr21 = verts21[b_idx, idx22]                # (B, N2, k, 3)
    map12 = jnp.mean(jnp.sum((corr_nbr12 - nbr_corr12) ** 2, axis=(1, 2)))
    map21 = jnp.mean(jnp.sum((corr_nbr21 - nbr_corr21) ** 2, axis=(1, 2)))
    map_loss = w_map * (map12 + map21) / 2.0

    # ------------------ self-reconstruction chamfer ----------------------------
    sr12 = chamfer_loss(verts12, verts2, max_tile=max_tile, vmem_limit=vmem_limit)
    sr21 = chamfer_loss(verts21, verts1, max_tile=max_tile, vmem_limit=vmem_limit)
    self_rec_loss = (sr12 + sr21) * N * w_self_rec / 2.0

    # ------------------ cross deform loss --------------------------------------
    # TODO(synk): needs external `deformer` net + DeformationGraph_geod / ARAP;
    # contributes 0 here.
    deform_loss = jnp.asarray(0.0, _F32) * (w_cd + w_arap) * N * w_deform / 2.0

    # ------------------ rank loss (triangular, bf16 Pi) -------------------------
    rank_loss = (jnp.mean(rank_frobenius_norms(Pi12_pad, N1, vmem_limit=vmem_limit))
                 + jnp.mean(rank_frobenius_norms(Pi21_pad, N2, vmem_limit=vmem_limit))
                 ) * w_rank / 2.0

    loss = dist_loss + deform_loss + map_loss + self_rec_loss + rank_loss
    return loss, dist_loss, deform_loss, map_loss, self_rec_loss


# ---------------------------------------------------------------------------
if __name__ == "__main__":
    key = jax.random.PRNGKey(0)
    B, N, D = 2, 32, 16
    k1, k2, k3, k4 = jax.random.split(key, 4)
    feat1 = jax.random.normal(k1, (B, N, D), _F32)
    feat2 = jax.random.normal(k2, (B, N, D), _F32)
    verts1 = jax.random.normal(k3, (B, N, 3), _F32)
    verts2 = jax.random.normal(k4, (B, N, 3), _F32)

    def dense_cdist(x):
        d = jnp.sum((x[:, :, None, :] - x[:, None, :, :]) ** 2, axis=-1)
        return jnp.sqrt(jnp.maximum(d, 0.0))

    dist1 = dense_cdist(verts1)     # stand-in geodesic distance matrices
    dist2 = dense_cdist(verts2)

    out = graph_deform_loss_neural_forward(
        feat1, feat2, dist1, dist2, verts1, verts2, 30.0,
        k_dist=4, N_dist=8, k_deform=4)
    out = jax.block_until_ready(out)
    loss, dist_loss, deform_loss, map_loss, self_rec_loss = out
    assert all(bool(jnp.isfinite(x)) for x in out)
    print("KERNEL_OK")
</pallas_src>

<mosaic_0001>
module attributes {stable_mosaic.version = 11 : i64} {
  func.func @_knn_kernel(%arg0: i32, %arg1: i32, %arg2: memref<1x32x3xf32, #tpu.memory_space<vmem>>, %arg3: memref<1x3x32xf32, #tpu.memory_space<vmem>>, %arg4: memref<1x32x4xi32, #tpu.memory_space<vmem>>) attributes {dimension_semantics = [#tpu.dimension_semantics<parallel>, #tpu.dimension_semantics<parallel>], iteration_bounds = array<i64: 2, 1>, scalar_prefetch = 0 : i64, scratch_operands = 0 : i64, tpu.core_type = #tpu.core_type<tc>, window_params = [{transform_indices = @transform_0, window_bounds = array<i64: 1, 32, 3>}, {transform_indices = @transform_1, window_bounds = array<i64: 1, 3, 32>}, {transform_indices = @transform_2, window_bounds = array<i64: 1, 32, 4>}]} {
    %c0 = arith.constant 0 : index
    %c0_0 = arith.constant 0 : index
    %c0_1 = arith.constant 0 : index
    %0 = vector.load %arg2[%c0, %c0_0, %c0_1] : memref<1x32x3xf32, #tpu.memory_space<vmem>>, vector<1x32x3xf32>
    %1 = vector.shape_cast %0 : vector<1x32x3xf32> to vector<32x3xf32>
    %c0_2 = arith.constant 0 : index
    %c0_3 = arith.constant 0 : index
    %c0_4 = arith.constant 0 : index
    %2 = vector.load %arg3[%c0_2, %c0_3, %c0_4] : memref<1x3x32xf32, #tpu.memory_space<vmem>>, vector<1x3x32xf32>
    %3 = vector.shape_cast %2 : vector<1x3x32xf32> to vector<3x32xf32>
    %cst = arith.constant 0.000000e+00 : f32
    %4 = vector.broadcast %cst : f32 to vector<32x32xf32>
    %5 = vector.extract_strided_slice %1 {offsets = [0, 0], sizes = [32, 1], strides = [1, 1]} : vector<32x3xf32> to vector<32x1xf32>
    %6 = vector.extract_strided_slice %3 {offsets = [0, 0], sizes = [1, 32], strides = [1, 1]} : vector<3x32xf32> to vector<1x32xf32>
    %7 = vector.broadcast %5 : vector<32x1xf32> to vector<32x32xf32>
    %8 = vector.broadcast %6 : vector<1x32xf32> to vector<32x32xf32>
    %9 = arith.subf %7, %8 : vector<32x32xf32>
    %10 = arith.mulf %9, %9 : vector<32x32xf32>
    %11 = arith.addf %4, %10 : vector<32x32xf32>
    %12 = vector.extract_strided_slice %1 {offsets = [0, 1], sizes = [32, 1], strides = [1, 1]} : vector<32x3xf32> to vector<32x1xf32>
    %13 = vector.extract_strided_slice %3 {offsets = [1, 0], sizes = [1, 32], strides = [1, 1]} : vector<3x32xf32> to vector<1x32xf32>
    %14 = vector.broadcast %12 : vector<32x1xf32> to vector<32x32xf32>
    %15 = vector.broadcast %13 : vector<1x32xf32> to vector<32x32xf32>
    %16 = arith.subf %14, %15 : vector<32x32xf32>
    %17 = arith.mulf %16, %16 : vector<32x32xf32>
    %18 = arith.addf %11, %17 : vector<32x32xf32>
    %19 = vector.extract_strided_slice %1 {offsets = [0, 2], sizes = [32, 1], strides = [1, 1]} : vector<32x3xf32> to vector<32x1xf32>
    %20 = vector.extract_strided_slice %3 {offsets = [2, 0], sizes = [1, 32], strides = [1, 1]} : vector<3x32xf32> to vector<1x32xf32>
    %21 = vector.broadcast %19 : vector<32x1xf32> to vector<32x32xf32>
    %22 = vector.broadcast %20 : vector<1x32xf32> to vector<32x32xf32>
    %23 = arith.subf %21, %22 : vector<32x32xf32>
    %24 = arith.mulf %23, %23 : vector<32x32xf32>
    %25 = arith.addf %18, %24 : vector<32x32xf32>
    %26 = tpu.iota {dimensions = array<i32: 1>} : vector<32x32xi32>
    %27 = tpu.iota {dimensions = array<i32: 1>} : vector<32x4xi32>
    %c0_i32 = arith.constant 0 : i32
    %28 = vector.broadcast %c0_i32 : i32 to vector<32x4xi32>
    %cst_5 = arith.constant dense<0x7F800000> : vector<32xf32>
    %29 = vector.multi_reduction <minimumf>, %25, %cst_5 [1] : vector<32x32xf32> to vector<32xf32>
    %30 = vector.shape_cast %29 : vector<32xf32> to vector<32x1xf32>
    %31 = vector.broadcast %30 : vector<32x1xf32> to vector<32x32xf32>
    %32 = arith.cmpf oeq, %25, %31 : vector<32x32xf32>
    %c32_i32 = arith.constant 32 : i32
    %33 = vector.broadcast %c32_i32 : i32 to vector<32x32xi32>
    %34 = arith.select %32, %26, %33 : vector<32x32xi1>, vector<32x32xi32>
    %cst_6 = arith.constant dense<2147483647> : vector<32xi32>
    %35 = vector.multi_reduction <minsi>, %34, %cst_6 [1] : vector<32x32xi32> to vector<32xi32>
    %36 = vector.shape_cast %35 : vector<32xi32> to vector<32x1xi32>
    %c31_i32 = arith.constant 31 : i32
    %37 = vector.broadcast %c31_i32 : i32 to vector<32x1xi32>
    %38 = arith.minsi %36, %37 : vector<32x1xi32>
    %c0_i32_7 = arith.constant 0 : i32
    %39 = vector.broadcast %c0_i32_7 : i32 to vector<32x4xi32>
    %40 = arith.cmpi eq, %27, %39 : vector<32x4xi32>
    %41 = vector.shape_cast %38 : vector<32x1xi32> to vector<32x1xi32>
    %42 = vector.broadcast %41 : vector<32x1xi32> to vector<32x4xi32>
    %43 = arith.select %40, %42, %28 : vector<32x4xi1>, vector<32x4xi32>
    %44 = vector.broadcast %38 : vector<32x1xi32> to vector<32x32xi32>
    %45 = arith.cmpi eq, %26, %44 : vector<32x32xi32>
    %cst_8 = arith.constant 0x7F800000 : f32
    %46 = vector.broadcast %cst_8 : f32 to vector<32x32xf32>
    %47 = arith.select %45, %46, %25 : vector<32x32xi1>, vector<32x32xf32>
    %cst_9 = arith.constant dense<0x7F800000> : vector<32xf32>
    %48 = vector.multi_reduction <minimumf>, %47, %cst_9 [1] : vector<32x32xf32> to vector<32xf32>
    %49 = vector.shape_cast %48 : vector<32xf32> to vector<32x1xf32>
    %50 = vector.broadcast %49 : vector<32x1xf32> to vector<32x32xf32>
    %51 = arith.cmpf oeq, %47, %50 : vector<32x32xf32>
    %c32_i32_10 = arith.constant 32 : i32
    %52 = vector.broadcast %c32_i32_10 : i32 to vector<32x32xi32>
    %53 = arith.select %51, %26, %52 : vector<32x32xi1>, vector<32x32xi32>
    %cst_11 = arith.constant dense<2147483647> : vector<32xi32>
    %54 = vector.multi_reduction <minsi>, %53, %cst_11 [1] : vector<32x32xi32> to vector<32xi32>
    %55 = vector.shape_cast %54 : vector<32xi32> to vector<32x1xi32>
    %c31_i32_12 = arith.constant 31 : i32
    %56 = vector.broadcast %c31_i32_12 : i32 to vector<32x1xi32>
    %57 = arith.minsi %55, %56 : vector<32x1xi32>
    %c1_i32 = arith.constant 1 : i32
    %58 = vector.broadcast %c1_i32 : i32 to vector<32x4xi32>
    %59 = arith.cmpi eq, %27, %58 : vector<32x4xi32>
    %60 = vector.shape_cast %57 : vector<32x1xi32> to vector<32x1xi32>
    %61 = vector.broadcast %60 : vector<32x1xi32> to vector<32x4xi32>
    %62 = arith.select %59, %61, %43 : vector<32x4xi1>, vector<32x4xi32>
    %63 = vector.broadcast %57 : vector<32x1xi32> to vector<32x32xi32>
    %64 = arith.cmpi eq, %26, %63 : vector<32x32xi32>
    %cst_13 = arith.constant 0x7F800000 : f32
    %65 = vector.broadcast %cst_13 : f32 to vector<32x32xf32>
    %66 = arith.select %64, %65, %47 : vector<32x32xi1>, vector<32x32xf32>
    %cst_14 = arith.constant dense<0x7F800000> : vector<32xf32>
    %67 = vector.multi_reduction <minimumf>, %66, %cst_14 [1] : vector<32x32xf32> to vector<32xf32>
    %68 = vector.shape_cast %67 : vector<32xf32> to vector<32x1xf32>
    %69 = vector.broadcast %68 : vector<32x1xf32> to vector<32x32xf32>
    %70 = arith.cmpf oeq, %66, %69 : vector<32x32xf32>
    %c32_i32_15 = arith.constant 32 : i32
    %71 = vector.broadcast %c32_i32_15 : i32 to vector<32x32xi32>
    %72 = arith.select %70, %26, %71 : vector<32x32xi1>, vector<32x32xi32>
    %cst_16 = arith.constant dense<2147483647> : vector<32xi32>
    %73 = vector.multi_reduction <minsi>, %72, %cst_16 [1] : vector<32x32xi32> to vector<32xi32>
    %74 = vector.shape_cast %73 : vector<32xi32> to vector<32x1xi32>
    %c31_i32_17 = arith.constant 31 : i32
    %75 = vector.broadcast %c31_i32_17 : i32 to vector<32x1xi32>
    %76 = arith.minsi %74, %75 : vector<32x1xi32>
    %c2_i32 = arith.constant 2 : i32
    %77 = vector.broadcast %c2_i32 : i32 to vector<32x4xi32>
    %78 = arith.cmpi eq, %27, %77 : vector<32x4xi32>
    %79 = vector.shape_cast %76 : vector<32x1xi32> to vector<32x1xi32>
    %80 = vector.broadcast %79 : vector<32x1xi32> to vector<32x4xi32>
    %81 = arith.select %78, %80, %62 : vector<32x4xi1>, vector<32x4xi32>
    %82 = vector.broadcast %76 : vector<32x1xi32> to vector<32x32xi32>
    %83 = arith.cmpi eq, %26, %82 : vector<32x32xi32>
    %cst_18 = arith.constant 0x7F800000 : f32
    %84 = vector.broadcast %cst_18 : f32 to vector<32x32xf32>
    %85 = arith.select %83, %84, %66 : vector<32x32xi1>, vector<32x32xf32>
    %cst_19 = arith.constant dense<0x7F800000> : vector<32xf32>
    %86 = vector.multi_reduction <minimumf>, %85, %cst_19 [1] : vector<32x32xf32> to vector<32xf32>
    %87 = vector.shape_cast %86 : vector<32xf32> to vector<32x1xf32>
    %88 = vector.broadcast %87 : vector<32x1xf32> to vector<32x32xf32>
    %89 = arith.cmpf oeq, %85, %88 : vector<32x32xf32>
    %c32_i32_20 = arith.constant 32 : i32
    %90 = vector.broadcast %c32_i32_20 : i32 to vector<32x32xi32>
    %91 = arith.select %89, %26, %90 : vector<32x32xi1>, vector<32x32xi32>
    %cst_21 = arith.constant dense<2147483647> : vector<32xi32>
    %92 = vector.multi_reduction <minsi>, %91, %cst_21 [1] : vector<32x32xi32> to vector<32xi32>
    %93 = vector.shape_cast %92 : vector<32xi32> to vector<32x1xi32>
    %c31_i32_22 = arith.constant 31 : i32
    %94 = vector.broadcast %c31_i32_22 : i32 to vector<32x1xi32>
    %95 = arith.minsi %93, %94 : vector<32x1xi32>
    %c3_i32 = arith.constant 3 : i32
    %96 = vector.broadcast %c3_i32 : i32 to vector<32x4xi32>
    %97 = arith.cmpi eq, %27, %96 : vector<32x4xi32>
    %98 = vector.shape_cast %95 : vector<32x1xi32> to vector<32x1xi32>
    %99 = vector.broadcast %98 : vector<32x1xi32> to vector<32x4xi32>
    %100 = arith.select %97, %99, %81 : vector<32x4xi1>, vector<32x4xi32>
    %c0_23 = arith.constant 0 : index
    %c0_24 = arith.constant 0 : index
    %c0_25 = arith.constant 0 : index
    %101 = vector.load %arg4[%c0_23, %c0_24, %c0_25] : memref<1x32x4xi32, #tpu.memory_space<vmem>>, vector<1x32x4xi32>
    %102 = vector.shape_cast %101 : vector<1x32x4xi32> to vector<32x4xi32>
    %103 = vector.shape_cast %100 : vector<32x4xi32> to vector<1x32x4xi32>
    tpu.vector_store %arg4[%c0_23, %c0_24, %c0_25], %103 {strides = array<i32>} : memref<1x32x4xi32, #tpu.memory_space<vmem>>, vector<1x32x4xi32>,
    return
  }
  func.func @transform_0(%arg0: i32, %arg1: i32) -> (i32, i32, i32) {
    %c0_i32 = arith.constant 0 : i32
    %c0_i32_0 = arith.constant 0 : i32
    return %arg0, %arg1, %c0_i32 : i32, i32, i32
  }
  func.func @transform_1(%arg0: i32, %arg1: i32) -> (i32, i32, i32) {
    %c0_i32 = arith.constant 0 : i32
    %c0_i32_0 = arith.constant 0 : i32
    %c0_i32_1 = arith.constant 0 : i32
    return %arg0, %c0_i32, %c0_i32_0 : i32, i32, i32
  }
  func.func @transform_2(%arg0: i32, %arg1: i32) -> (i32, i32, i32) {
    %c0_i32 = arith.constant 0 : i32
    %c0_i32_0 = arith.constant 0 : i32
    return %arg0, %arg1, %c0_i32 : i32, i32, i32
  }
}

</mosaic_0001>

<llo_original>
// kernel: tpu_custom_call.1
$region0: #{tpu_custom_call.1}
  #allocation0 [shape = 'u32[]', space=smem, size = 0x4, offset = 0x4, fixed_abs, tag = 'smem constant byte address 0x4 - core index']
  #allocation1 [shape = 'u32[144,128]{1,0:T(1,128)}', space=vmem, size = 0x12000, scoped, tag = 'internal scratch']
  %s0 = inlined_call_operand.vmem [shape: f32[2,32,3], index: 0, kind: input, shape index: {}]
  %s1 = inlined_call_operand.vmem [shape: f32[2,3,32], index: 1, kind: input, shape index: {}]
  %s2 = inlined_call_operand.vmem [shape: s32[2,32,4], index: 2, kind: output, shape index: {}]
  %s3 = sld [smem:[#allocation0]]
  $region41: #{tpu_custom_call.1} parent=0
    _
  %s5 = ssub.s32 1, %s3
  %s6 = scalar_select 0, %s5, %s3
  loop: start=0, step=1, limit=4
  $region2: #{tpu_custom_call.1} parent=0 // loop_pre_header
    _
  $region3: #{tpu_custom_call.1} parent=0 // loop_header
    %s8 = sphi 0, %s12
    %p9 = scmp.ge.s32.totalorder %s8, 4
    %s15 = sphi 0, %s27
    %s16 = sphi 0, %s23
    %s17 = sphi 0, %s15
    %s18 = sphi 0, %s16
    %s19 = sphi 0, %s17
    %s20 = sphi 0, %s18
    %s32 = sphi 0, %s34
    %s35 = sphi 0, %s32
    %s36 = sphi 0, %s35
    %s52 = sphi 0, %s36
    %s58 = sphi 0, %s60
    %s61 = sphi 0, %s58
    %s62 = sphi 0, %s61
    %s78 = sphi 0, %s62
    %s86 = sphi 0, %s88
    %s89 = sphi 0, %s86
    %s90 = sphi 0, %s89
    %s106 = sphi 0, %s90
  $region4: #{tpu_custom_call.1} parent=0 // loop_header_branch
    %11 = sbr.rel (%p9) target = $region8
  $region5: #{tpu_custom_call.1} parent=0 // loop_body
    %s13 = ssub.s32 %s8, 1
    %s14 = ssub.s32 %s8, 2
    %s21 = sadd.s32 1, %s16
    %p22 = scmp.ge.s32.totalorder %s21, 1
    %s23 = scalar_select %p22, 0, %s21
    %s24 = sadd.s32 1, %s15
    %s25 = scalar_select %p22, %s24, %s15
    %p26 = scmp.ge.s32.totalorder %s25, 2
    %s27 = scalar_select %p26, 0, %s25
    %s28 = ssub.s32 %s15, %s27
    %s29 = ssub.s32 %s16, %s23
    %s30 = sor.u32 %s28, %s29
    %p31 = scmp.eq.s32.totalorder %s30, 0
    %s33 = sadd.s32 %s32, 1
    %s34 = scalar_select %p31, %s32, %s33
    %p37 = pneg %p31
    %p38 = scmp.eq.s32.totalorder %s8, 1
    %p39 = por %p37, %p38
    %p40 = scmp.ne.s32.totalorder %s32, %s35
    %p41 = scmp.eq.s32.totalorder %s8, 0
    %p42 = por %p40, %p41
    %p43 = scmp.ne.s32.totalorder %s32, %s35
    %p44 = scmp.eq.s32.totalorder %s13, 1
    %p45 = por %p43, %p44
    %p46 = scmp.ne.s32.totalorder %s35, %s36
    %p47 = scmp.eq.s32.totalorder %s13, 0
    %p48 = por %p46, %p47
    %p49 = scmp.ne.s32.totalorder %s35, %s36
    %p50 = scmp.eq.s32.totalorder %s14, 1
    %p51 = por %p49, %p50
    %p53 = scmp.ne.s32.totalorder %s36, %s52
    %p54 = scmp.eq.s32.totalorder %s14, 0
    %p55 = por %p53, %p54
    %s56 = ssub.s32 %s15, %s27
    %p57 = scmp.eq.s32.totalorder %s56, 0
    %s59 = sadd.s32 %s58, 1
    %s60 = scalar_select %p57, %s58, %s59
    %p63 = pneg %p57
    %p64 = scmp.eq.s32.totalorder %s8, 1
    %p65 = por %p63, %p64
    %p66 = scmp.ne.s32.totalorder %s58, %s61
    %p67 = scmp.eq.s32.totalorder %s8, 0
    %p68 = por %p66, %p67
    %p69 = scmp.ne.s32.totalorder %s58, %s61
    %p70 = scmp.eq.s32.totalorder %s13, 1
    %p71 = por %p69, %p70
    %p72 = scmp.ne.s32.totalorder %s61, %s62
    %p73 = scmp.eq.s32.totalorder %s13, 0
    %p74 = por %p72, %p73
    %p75 = scmp.ne.s32.totalorder %s61, %s62
    %p76 = scmp.eq.s32.totalorder %s14, 1
    %p77 = por %p75, %p76
    %p79 = scmp.ne.s32.totalorder %s62, %s78
    %p80 = scmp.eq.s32.totalorder %s14, 0
    %p81 = por %p79, %p80
    %s82 = ssub.s32 %s15, %s27
    %s83 = ssub.s32 %s16, %s23
    %s84 = sor.u32 %s82, %s83
    %p85 = scmp.eq.s32.totalorder %s84, 0
    %s87 = sadd.s32 %s86, 1
    %s88 = scalar_select %p85, %s86, %s87
    %p91 = pneg %p85
    %p92 = scmp.eq.s32.totalorder %s8, 1
    %p93 = por %p91, %p92
    %p94 = scmp.ne.s32.totalorder %s86, %s89
    %p95 = scmp.eq.s32.totalorder %s8, 0
    %p96 = por %p94, %p95
    %p97 = scmp.ne.s32.totalorder %s86, %s89
    %p98 = scmp.eq.s32.totalorder %s13, 1
    %p99 = por %p97, %p98
    %p100 = scmp.ne.s32.totalorder %s89, %s90
    %p101 = scmp.eq.s32.totalorder %s13, 0
    %p102 = por %p100, %p101
    %p103 = scmp.ne.s32.totalorder %s89, %s90
    %p104 = scmp.eq.s32.totalorder %s14, 1
    %p105 = por %p103, %p104
    %p107 = scmp.ne.s32.totalorder %s90, %s106
    %p108 = scmp.eq.s32.totalorder %s14, 0
    %p109 = por %p107, %p108
    %p110 = scmp.le.s32.totalorder 1, %s8
    %p111 = scmp.lt.s32.totalorder %s8, 3
    %p112 = pnand %p110, %p111
    %p113 = pneg %p112
    // Predicated region
    $region9: #{tpu_custom_call.1} parent=5 // pred_check
      _
    $region10: #{tpu_custom_call.1} parent=5 // pred_check_branch
      %115 = sbr.rel (%p112) target = $region12
    $region11: #{tpu_custom_call.1} parent=5 // pred_region
      %s116 = ssub.s32 %s8, 1
    $region12: #{tpu_custom_call.1} parent=5 // pred_fallthru
      _
    %p117 = scmp.lt.s32.totalorder %s8, 2
    // Predicated region
    $region13: #{tpu_custom_call.1} parent=5 // pred_check
      %p118 = pneg %p117
    $region14: #{tpu_custom_call.1} parent=5 // pred_check_branch
      %120 = sbr.rel (%p118) target = $region16
    $region15: #{tpu_custom_call.1} parent=5 // pred_region
      // Predicated region
      $region17: #{tpu_custom_call.1} parent=15 // pred_check
        %p121 = pneg %p42
      $region18: #{tpu_custom_call.1} parent=15 // pred_check_branch
        %123 = sbr.rel (%p121) target = $region20
      $region19: #{tpu_custom_call.1} parent=15 // pred_region
        %s124 = smul.u32 4, %s16
        %p125 = scmp.lt.s32.totalorder %s15, 1
        %s126 = scalar_select %p125, %s15, 1
        %p127 = scmp.lt.s32.totalorder %s124, 3
        %s128 = scalar_select %p127, %s124, 3
        %s129 = smul.addr %s126, 4
        %s130 = sadd.s32 %s128, %s129
        %s131 = smul.addr %s130, 8
        %s132 = scalar_lea.vmem %s0, %s131
        %s133 = smul.u32 4, %s16
      $region20: #{tpu_custom_call.1} parent=15 // pred_fallthru
        _
      // Predicated region
      $region21: #{tpu_custom_call.1} parent=15 // pred_check
        %p134 = pneg %p68
      $region22: #{tpu_custom_call.1} parent=15 // pred_check_branch
        %136 = sbr.rel (%p134) target = $region24
      $region23: #{tpu_custom_call.1} parent=15 // pred_region
        %p137 = scmp.lt.s32.totalorder %s15, 1
        %s138 = scalar_select %p137, %s15, 1
        %s139 = smul.addr %s138, 4
        %s140 = scalar_lea.vmem %s1, %s139
      $region24: #{tpu_custom_call.1} parent=15 // pred_fallthru
        _
    $region16: #{tpu_custom_call.1} parent=5 // pred_fallthru
      _
    %p141 = scmp.le.s32.totalorder 1, %s8
    %p142 = scmp.lt.s32.totalorder %s8, 3
    %p143 = pnand %p141, %p142
    %p144 = pneg %p143
    // Predicated region
    $region25: #{tpu_custom_call.1} parent=5 // pred_check
      _
    $region26: #{tpu_custom_call.1} parent=5 // pred_check_branch
      %146 = sbr.rel (%p143) target = $region28
    $region27: #{tpu_custom_call.1} parent=5 // pred_region
      %s147 = ssub.s32 %s8, 1
      %s148 = smul.u32 4, %s18
      %p149 = scmp.lt.s32.totalorder %s17, 1
      %s150 = scalar_select %p149, %s17, 1
      %p151 = scmp.lt.s32.totalorder %s148, 3
      %s152 = scalar_select %p151, %s148, 3
      %s153 = smul.addr %s150, 4
      %s154 = sadd.s32 %s152, %s153
      %s155 = smul.addr %s154, 8
      %s156 = scalar_lea.vmem %s0, %s155
      %p157 = pneg %p48
      %p158 = pneg %p45
      %p159 = scmp.lt.s32.totalorder %s17, 1
      %s160 = scalar_select %p159, %s17, 1
      %s161 = smul.addr %s160, 4
      %s162 = scalar_lea.vmem %s1, %s161
      %p163 = pneg %p74
      %p164 = pneg %p71
      %p165 = pneg %p102
      %p166 = pneg %p99
      %s167 = smul.u32 4, %s18
      %p168 = scmp.lt.s32.totalorder %s17, 1
      %s169 = scalar_select %p168, %s17, 1
      %p170 = scmp.lt.s32.totalorder %s167, 3
      %s171 = scalar_select %p170, %s167, 3
      %s172 = smul.addr %s169, 4
      %s173 = sadd.s32 %s171, %s172
      %s174 = smul.addr %s173, 8
      %s175 = scalar_lea.vmem %s2, %s174
      %s176 = smul.u32 4, %s18
      %p177 = scmp.lt.s32.totalorder %s17, 1
      %s178 = scalar_select %p177, %s17, 1
      %p179 = scmp.lt.s32.totalorder %s176, 3
      %s180 = scalar_select %p179, %s176, 3
      %s181 = smul.addr %s178, 4
      %s182 = sadd.s32 %s180, %s181
      %s183 = smul.addr %s182, 8
      %s184 = scalar_lea.vmem %s0, %s183
      %s185 = smul.u32 4, %s18
      %p186 = scmp.lt.s32.totalorder %s17, 1
      %s187 = scalar_select %p186, %s17, 1
      %s188 = smul.addr %s187, 4
      %s189 = scalar_lea.vmem %s1, %s188
      %s190 = smul.u32 4, %s18
      %p191 = scmp.lt.s32.totalorder %s17, 1
      %s192 = scalar_select %p191, %s17, 1
      %p193 = scmp.lt.s32.totalorder %s190, 3
      %s194 = scalar_select %p193, %s190, 3
      %s195 = smul.addr %s192, 4
      %s196 = sadd.s32 %s194, %s195
      %s197 = smul.addr %s196, 8
      %s198 = scalar_lea.vmem %s2, %s197
      %s199 = smul.u32 4, %s18
      %v200 = vld [vmem:[%s184] sm:$0xff]
      %v201 = vld [vmem:[%s184 + $0x8] sm:$0xff]
      %v202 = vld [vmem:[%s184 + $0x10] sm:$0xff]
      %v203 = vld [vmem:[%s184 + $0x18] sm:$0xff]
      %v204 = vld [vmem:[%s189] sm:$0x7]
      %206 = vset.pattern.permute.xlu0 0
      %207 = vperm.xlu0 %206, %v200
      %v208 = vpop.permute.xlu0 %207
      %211 = vset.pattern.permute.xlu0 0
      %212 = vperm.xlu0 %211, %v201
      %v213 = vpop.permute.xlu0 %212
      %216 = vset.pattern.permute.xlu0 0
      %217 = vperm.xlu0 %216, %v202
      %v218 = vpop.permute.xlu0 %217
      %221 = vset.pattern.permute.xlu0 0
      %222 = vperm.xlu0 %221, %v203
      %v223 = vpop.permute.xlu0 %222
      %v225 = vlaneseq
      %v226 = vshrl.u32 %v225, 7
      %v227 = vsub.s32 0, %v226
      %v228 = vrot.slane %v204, %v227
      %v229 = vsub.f32 %v208, %v228
      %v230 = vsub.f32 %v213, %v228
      %v231 = vsub.f32 %v218, %v228
      %v232 = vsub.f32 %v223, %v228
      %v233 = vmul.f32 %v229, %v229
      %v234 = vmul.f32 %v230, %v230
      %v235 = vmul.f32 %v231, %v231
      %v236 = vmul.f32 %v232, %v232
      %v237 = vadd.f32 %v233, 0.0
      %v238 = vadd.f32 %v234, 0.0
      %v239 = vadd.f32 %v235, 0.0
      %v240 = vadd.f32 %v236, 0.0
      %241 = vset.pattern.permute.xlu0 1
      %242 = vperm.xlu0 %241, %v200
      %v243 = vpop.permute.xlu0 %242
      %245 = vset.pattern.permute.xlu0 1
      %246 = vperm.xlu0 %245, %v201
      %v247 = vpop.permute.xlu0 %246
      %249 = vset.pattern.permute.xlu0 1
      %250 = vperm.xlu0 %249, %v202
      %v251 = vpop.permute.xlu0 %250
      %253 = vset.pattern.permute.xlu0 1
      %254 = vperm.xlu0 %253, %v203
      %v255 = vpop.permute.xlu0 %254
      %v257 = vlaneseq
      %v258 = vshrl.u32 %v257, 7
      %v259 = vsub.s32 1, %v258
      %v260 = vrot.slane %v204, %v259
      %v261 = vsub.f32 %v243, %v260
      %v262 = vsub.f32 %v247, %v260
      %v263 = vsub.f32 %v251, %v260
      %v264 = vsub.f32 %v255, %v260
      %v265 = vmul.f32 %v261, %v261
      %v266 = vmul.f32 %v262, %v262
      %v267 = vmul.f32 %v263, %v263
      %v268 = vmul.f32 %v264, %v264
      %v269 = vadd.f32 %v237, %v265
      %v270 = vadd.f32 %v238, %v266
      %v271 = vadd.f32 %v239, %v267
      %v272 = vadd.f32 %v240, %v268
      %273 = vset.pattern.permute.xlu0 2
      %274 = vperm.xlu0 %273, %v200
      %v275 = vpop.permute.xlu0 %274
      %277 = vset.pattern.permute.xlu0 2
      %278 = vperm.xlu0 %277, %v201
      %v279 = vpop.permute.xlu0 %278
      %281 = vset.pattern.permute.xlu0 2
      %282 = vperm.xlu0 %281, %v202
      %v283 = vpop.permute.xlu0 %282
      %285 = vset.pattern.permute.xlu0 2
      %286 = vperm.xlu0 %285, %v203
      %v287 = vpop.permute.xlu0 %286
      %v289 = vlaneseq
      %v290 = vshrl.u32 %v289, 7
      %v291 = vsub.s32 2, %v290
      %v292 = vrot.slane %v204, %v291
      %v293 = vsub.f32 %v275, %v292
      %v294 = vsub.f32 %v279, %v292
      %v295 = vsub.f32 %v283, %v292
      %v296 = vsub.f32 %v287, %v292
      %v297 = vmul.f32 %v293, %v293
      %v298 = vmul.f32 %v294, %v294
      %v299 = vmul.f32 %v295, %v295
      %v300 = vmul.f32 %v296, %v296
      %v301 = vadd.f32 %v269, %v297
      %v302 = vadd.f32 %v270, %v298
      %v303 = vadd.f32 %v271, %v299
      %v304 = vadd.f32 %v272, %v300
      %v305 = vlaneseq
      %v306 = vand.u32 %v305, 127
      %vm307 = vcmask 261120
      %v308 = vsel %vm307, %v301, inf
      %309 = vmin.xlane.f32.xlu0 %v308
      %v310 = vpop.xlane.xlu0 %309
      %v311 = vsel %vm307, %v302, inf
      %312 = vmin.xlane.f32.xlu0 %v311
      %v313 = vpop.xlane.xlu0 %312
      %v314 = vsel %vm307, %v303, inf
      %315 = vmin.xlane.f32.xlu0 %v314
      %v316 = vpop.xlane.xlu0 %315
      %v317 = vsel %vm307, %v304, inf
      %318 = vmin.xlane.f32.xlu0 %v317
      %v319 = vpop.xlane.xlu0 %318
      %vm320 = vcmp.eq.f32.partialorder %v301, %v310
      %vm321 = vcmp.eq.f32.partialorder %v302, %v313
      %vm322 = vcmp.eq.f32.partialorder %v303, %v316
      %vm323 = vcmp.eq.f32.partialorder %v304, %v319
      %v324 = vsel %vm320, %v306, 32
      %v325 = vsel %vm321, %v306, 32
      %v326 = vsel %vm322, %v306, 32
      %v327 = vsel %vm323, %v306, 32
      %v328 = vsel %vm307, %v324, 2147483647
      %v329 = vand.u32 %v328, 65535
      %v330 = vshra.s32 %v328, 16
      %v331 = vcvt.s32.f32 %v329
      %v332 = vcvt.s32.f32 %v330
      %333 = vmin.xlane.f32.xlu0 %v332
      %v334 = vpop.xlane.xlu0 %333
      %vm335 = vcmp.eq.f32.partialorder %v332, %v334
      %v336 = vsel %vm335, %v331, inf
      %337 = vmin.xlane.f32.xlu0 %v336
      %v338 = vpop.xlane.xlu0 %337
      %v339 = vcvt.f32.s32 %v338
      %v340 = vcvt.f32.s32 %v334
      %v341 = vshll.u32 %v340, 16
      %v342 = vadd.s32 %v341, %v339
      %v343 = vsel %vm307, %v325, 2147483647
      %v344 = vand.u32 %v343, 65535
      %v345 = vshra.s32 %v343, 16
      %v346 = vcvt.s32.f32 %v344
      %v347 = vcvt.s32.f32 %v345
      %348 = vmin.xlane.f32.xlu0 %v347
      %v349 = vpop.xlane.xlu0 %348
      %vm350 = vcmp.eq.f32.partialorder %v347, %v349
      %v351 = vsel %vm350, %v346, inf
      %352 = vmin.xlane.f32.xlu0 %v351
      %v353 = vpop.xlane.xlu0 %352
      %v354 = vcvt.f32.s32 %v353
      %v355 = vcvt.f32.s32 %v349
      %v356 = vshll.u32 %v355, 16
      %v357 = vadd.s32 %v356, %v354
      %v358 = vsel %vm307, %v326, 2147483647
      %v359 = vand.u32 %v358, 65535
      %v360 = vshra.s32 %v358, 16
      %v361 = vcvt.s32.f32 %v359
      %v362 = vcvt.s32.f32 %v360
      %363 = vmin.xlane.f32.xlu0 %v362
      %v364 = vpop.xlane.xlu0 %363
      %vm365 = vcmp.eq.f32.partialorder %v362, %v364
      %v366 = vsel %vm365, %v361, inf
      %367 = vmin.xlane.f32.xlu0 %v366
      %v368 = vpop.xlane.xlu0 %367
      %v369 = vcvt.f32.s32 %v368
      %v370 = vcvt.f32.s32 %v364
      %v371 = vshll.u32 %v370, 16
      %v372 = vadd.s32 %v371, %v369
      %v373 = vsel %vm307, %v327, 2147483647
      %v374 = vand.u32 %v373, 65535
      %v375 = vshra.s32 %v373, 16
      %v376 = vcvt.s32.f32 %v374
      %v377 = vcvt.s32.f32 %v375
      %378 = vmin.xlane.f32.xlu0 %v377
      %v379 = vpop.xlane.xlu0 %378
      %vm380 = vcmp.eq.f32.partialorder %v377, %v379
      %v381 = vsel %vm380, %v376, inf
      %382 = vmin.xlane.f32.xlu0 %v381
      %v383 = vpop.xlane.xlu0 %382
      %v384 = vcvt.f32.s32 %v383
      %v385 = vcvt.f32.s32 %v379
      %v386 = vshll.u32 %v385, 16
      %v387 = vadd.s32 %v386, %v384
      %vm388 = vcmp.lt.s32.totalorder %v342, 31
      %v389 = vsel %vm388, %v342, 31
      %vm390 = vcmp.lt.s32.totalorder %v357, 31
      %v391 = vsel %vm390, %v357, 31
      %vm392 = vcmp.lt.s32.totalorder %v372, 31
      %v393 = vsel %vm392, %v372, 31
      %vm394 = vcmp.lt.s32.totalorder %v387, 31
      %v395 = vsel %vm394, %v387, 31
      %vm396 = vcmp.eq.s32.totalorder %v306, 0
      %v397 = vsel %vm396, %v389, 0
      %v398 = vsel %vm396, %v391, 0
      %v399 = vsel %vm396, %v393, 0
      %v400 = vsel %vm396, %v395, 0
      %vm401 = vcmp.eq.s32.totalorder %v306, %v389
      %vm402 = vcmp.eq.s32.totalorder %v306, %v391
      %vm403 = vcmp.eq.s32.totalorder %v306, %v393
      %vm404 = vcmp.eq.s32.totalorder %v306, %v395
      %v405 = vsel %vm401, inf, %v301
      %v406 = vsel %vm402, inf, %v302
      %v407 = vsel %vm403, inf, %v303
      %v408 = vsel %vm404, inf, %v304
      %v409 = vsel %vm307, %v405, inf
      %410 = vmin.xlane.f32.xlu0 %v409
      %v411 = vpop.xlane.xlu0 %410
      %v412 = vsel %vm307, %v406, inf
      %413 = vmin.xlane.f32.xlu0 %v412
      %v414 = vpop.xlane.xlu0 %413
      %v415 = vsel %vm307, %v407, inf
      %416 = vmin.xlane.f32.xlu0 %v415
      %v417 = vpop.xlane.xlu0 %416
      %v418 = vsel %vm307, %v408, inf
      %419 = vmin.xlane.f32.xlu0 %v418
      %v420 = vpop.xlane.xlu0 %419
      %vm421 = vcmp.eq.f32.partialorder %v405, %v411
      %vm422 = vcmp.eq.f32.partialorder %v406, %v414
      %vm423 = vcmp.eq.f32.partialorder %v407, %v417
      %vm424 = vcmp.eq.f32.partialorder %v408, %v420
      %v425 = vsel %vm421, %v306, 32
      %v426 = vsel %vm422, %v306, 32
      %v427 = vsel %vm423, %v306, 32
      %v428 = vsel %vm424, %v306, 32
      %v429 = vsel %vm307, %v425, 2147483647
      %v430 = vand.u32 %v429, 65535
      %v431 = vshra.s32 %v429, 16
      %v432 = vcvt.s32.f32 %v430
      %v433 = vcvt.s32.f32 %v431
      %434 = vmin.xlane.f32.xlu0 %v433
      %v435 = vpop.xlane.xlu0 %434
      %vm436 = vcmp.eq.f32.partialorder %v433, %v435
      %v437 = vsel %vm436, %v432, inf
      %438 = vmin.xlane.f32.xlu0 %v437
      %v439 = vpop.xlane.xlu0 %438
      %v440 = vcvt.f32.s32 %v439
      %v441 = vcvt.f32.s32 %v435
      %v442 = vshll.u32 %v441, 16
      %v443 = vadd.s32 %v442, %v440
      %v444 = vsel %vm307, %v426, 2147483647
      %v445 = vand.u32 %v444, 65535
      %v446 = vshra.s32 %v444, 16
      %v447 = vcvt.s32.f32 %v445
      %v448 = vcvt.s32.f32 %v446
      %449 = vmin.xlane.f32.xlu0 %v448
      %v450 = vpop.xlane.xlu0 %449
      %vm451 = vcmp.eq.f32.partialorder %v448, %v450
      %v452 = vsel %vm451, %v447, inf
      %453 = vmin.xlane.f32.xlu0 %v452
      %v454 = vpop.xlane.xlu0 %453
      %v455 = vcvt.f32.s32 %v454
      %v456 = vcvt.f32.s32 %v450
      %v457 = vshll.u32 %v456, 16
      %v458 = vadd.s32 %v457, %v455
      %v459 = vsel %vm307, %v427, 2147483647
      %v460 = vand.u32 %v459, 65535
      %v461 = vshra.s32 %v459, 16
      %v462 = vcvt.s32.f32 %v460
      %v463 = vcvt.s32.f32 %v461
      %464 = vmin.xlane.f32.xlu0 %v463
      %v465 = vpop.xlane.xlu0 %464
      %vm466 = vcmp.eq.f32.partialorder %v463, %v465
      %v467 = vsel %vm466, %v462, inf
      %468 = vmin.xlane.f32.xlu0 %v467
      %v469 = vpop.xlane.xlu0 %468
      %v470 = vcvt.f32.s32 %v469
      %v471 = vcvt.f32.s32 %v465
      %v472 = vshll.u32 %v471, 16
      %v473 = vadd.s32 %v472, %v470
      %v474 = vsel %vm307, %v428, 2147483647
      %v475 = vand.u32 %v474, 65535
      %v476 = vshra.s32 %v474, 16
      %v477 = vcvt.s32.f32 %v475
      %v478 = vcvt.s32.f32 %v476
      %479 = vmin.xlane.f32.xlu0 %v478
      %v480 = vpop.xlane.xlu0 %479
      %vm481 = vcmp.eq.f32.partialorder %v478, %v480
      %v482 = vsel %vm481, %v477, inf
      %483 = vmin.xlane.f32.xlu0 %v482
      %v484 = vpop.xlane.xlu0 %483
      %v485 = vcvt.f32.s32 %v484
      %v486 = vcvt.f32.s32 %v480
      %v487 = vshll.u32 %v486, 16
      %v488 = vadd.s32 %v487, %v485
      %vm489 = vcmp.lt.s32.totalorder %v443, 31
      %v490 = vsel %vm489, %v443, 31
      %vm491 = vcmp.lt.s32.totalorder %v458, 31
      %v492 = vsel %vm491, %v458, 31
      %vm493 = vcmp.lt.s32.totalorder %v473, 31
      %v494 = vsel %vm493, %v473, 31
      %vm495 = vcmp.lt.s32.totalorder %v488, 31
      %v496 = vsel %vm495, %v488, 31
      %vm497 = vcmp.eq.s32.totalorder %v306, 1
      %v498 = vsel %vm497, %v490, %v397
      %v499 = vsel %vm497, %v492, %v398
      %v500 = vsel %vm497, %v494, %v399
      %v501 = vsel %vm497, %v496, %v400
      %vm502 = vcmp.eq.s32.totalorder %v306, %v490
      %vm503 = vcmp.eq.s32.totalorder %v306, %v492
      %vm504 = vcmp.eq.s32.totalorder %v306, %v494
      %vm505 = vcmp.eq.s32.totalorder %v306, %v496
      %v506 = vsel %vm502, inf, %v405
      %v507 = vsel %vm503, inf, %v406
      %v508 = vsel %vm504, inf, %v407
      %v509 = vsel %vm505, inf, %v408
      %v510 = vsel %vm307, %v506, inf
      %511 = vmin.xlane.f32.xlu0 %v510
      %v512 = vpop.xlane.xlu0 %511
      %v513 = vsel %vm307, %v507, inf
      %514 = vmin.xlane.f32.xlu0 %v513
      %v515 = vpop.xlane.xlu0 %514
      %v516 = vsel %vm307, %v508, inf
      %517 = vmin.xlane.f32.xlu0 %v516
      %v518 = vpop.xlane.xlu0 %517
      %v519 = vsel %vm307, %v509, inf
      %520 = vmin.xlane.f32.xlu0 %v519
      %v521 = vpop.xlane.xlu0 %520
      %vm522 = vcmp.eq.f32.partialorder %v506, %v512
      %vm523 = vcmp.eq.f32.partialorder %v507, %v515
      %vm524 = vcmp.eq.f32.partialorder %v508, %v518
      %vm525 = vcmp.eq.f32.partialorder %v509, %v521
      %v526 = vsel %vm522, %v306, 32
      %v527 = vsel %vm523, %v306, 32
      %v528 = vsel %vm524, %v306, 32
      %v529 = vsel %vm525, %v306, 32
      %v530 = vsel %vm307, %v526, 2147483647
      %v531 = vand.u32 %v530, 65535
      %v532 = vshra.s32 %v530, 16
      %v533 = vcvt.s32.f32 %v531
      %v534 = vcvt.s32.f32 %v532
      %535 = vmin.xlane.f32.xlu0 %v534
      %v536 = vpop.xlane.xlu0 %535
      %vm537 = vcmp.eq.f32.partialorder %v534, %v536
      %v538 = vsel %vm537, %v533, inf
      %539 = vmin.xlane.f32.xlu0 %v538
      %v540 = vpop.xlane.xlu0 %539
      %v541 = vcvt.f32.s32 %v540
      %v542 = vcvt.f32.s32 %v536
      %v543 = vshll.u32 %v542, 16
      %v544 = vadd.s32 %v543, %v541
      %v545 = vsel %vm307, %v527, 2147483647
      %v546 = vand.u32 %v545, 65535
      %v547 = vshra.s32 %v545, 16
      %v548 = vcvt.s32.f32 %v546
      %v549 = vcvt.s32.f32 %v547
      %550 = vmin.xlane.f32.xlu0 %v549
      %v551 = vpop.xlane.xlu0 %550
      %vm552 = vcmp.eq.f32.partialorder %v549, %v551
      %v553 = vsel %vm552, %v548, inf
      %554 = vmin.xlane.f32.xlu0 %v553
      %v555 = vpop.xlane.xlu0 %554
      %v556 = vcvt.f32.s32 %v555
      %v557 = vcvt.f32.s32 %v551
      %v558 = vshll.u32 %v557, 16
      %v559 = vadd.s32 %v558, %v556
      %v560 = vsel %vm307, %v528, 2147483647
      %v561 = vand.u32 %v560, 65535
      %v562 = vshra.s32 %v560, 16
      %v563 = vcvt.s32.f32 %v561
      %v564 = vcvt.s32.f32 %v562
      %565 = vmin.xlane.f32.xlu0 %v564
      %v566 = vpop.xlane.xlu0 %565
      %vm567 = vcmp.eq.f32.partialorder %v564, %v566
      %v568 = vsel %vm567, %v563, inf
      %569 = vmin.xlane.f32.xlu0 %v568
      %v570 = vpop.xlane.xlu0 %569
      %v571 = vcvt.f32.s32 %v570
      %v572 = vcvt.f32.s32 %v566
      %v573 = vshll.u32 %v572, 16
      %v574 = vadd.s32 %v573, %v571
      %v575 = vsel %vm307, %v529, 2147483647
      %v576 = vand.u32 %v575, 65535
      %v577 = vshra.s32 %v575, 16
      %v578 = vcvt.s32.f32 %v576
      %v579 = vcvt.s32.f32 %v577
      %580 = vmin.xlane.f32.xlu0 %v579
      %v581 = vpop.xlane.xlu0 %580
      %vm582 = vcmp.eq.f32.partialorder %v579, %v581
      %v583 = vsel %vm582, %v578, inf
      %584 = vmin.xlane.f32.xlu0 %v583
      %v585 = vpop.xlane.xlu0 %584
      %v586 = vcvt.f32.s32 %v585
      %v587 = vcvt.f32.s32 %v581
      %v588 = vshll.u32 %v587, 16
      %v589 = vadd.s32 %v588, %v586
      %vm590 = vcmp.lt.s32.totalorder %v544, 31
      %v591 = vsel %vm590, %v544, 31
      %vm592 = vcmp.lt.s32.totalorder %v559, 31
      %v593 = vsel %vm592, %v559, 31
      %vm594 = vcmp.lt.s32.totalorder %v574, 31
      %v595 = vsel %vm594, %v574, 31
      %vm596 = vcmp.lt.s32.totalorder %v589, 31
      %v597 = vsel %vm596, %v589, 31
      %vm598 = vcmp.eq.s32.totalorder %v306, 2
      %v599 = vsel %vm598, %v591, %v498
      %v600 = vsel %vm598, %v593, %v499
      %v601 = vsel %vm598, %v595, %v500
      %v602 = vsel %vm598, %v597, %v501
      %vm603 = vcmp.eq.s32.totalorder %v306, %v591
      %vm604 = vcmp.eq.s32.totalorder %v306, %v593
      %vm605 = vcmp.eq.s32.totalorder %v306, %v595
      %vm606 = vcmp.eq.s32.totalorder %v306, %v597
      %v607 = vsel %vm603, inf, %v506
      %v608 = vsel %vm604, inf, %v507
      %v609 = vsel %vm605, inf, %v508
      %v610 = vsel %vm606, inf, %v509
      %v611 = vsel %vm307, %v607, inf
      %612 = vmin.xlane.f32.xlu0 %v611
      %v613 = vpop.xlane.xlu0 %612
      %v614 = vsel %vm307, %v608, inf
      %615 = vmin.xlane.f32.xlu0 %v614
      %v616 = vpop.xlane.xlu0 %615
      %v617 = vsel %vm307, %v609, inf
      %618 = vmin.xlane.f32.xlu0 %v617
      %v619 = vpop.xlane.xlu0 %618
      %v620 = vsel %vm307, %v610, inf
      %621 = vmin.xlane.f32.xlu0 %v620
      %v622 = vpop.xlane.xlu0 %621
      %vm623 = vcmp.eq.f32.partialorder %v607, %v613
      %vm624 = vcmp.eq.f32.partialorder %v608, %v616
      %vm625 = vcmp.eq.f32.partialorder %v609, %v619
      %vm626 = vcmp.eq.f32.partialorder %v610, %v622
      %v627 = vsel %vm623, %v306, 32
      %v628 = vsel %vm624, %v306, 32
      %v629 = vsel %vm625, %v306, 32
      %v630 = vsel %vm626, %v306, 32
      %v631 = vsel %vm307, %v627, 2147483647
      %v632 = vand.u32 %v631, 65535
      %v633 = vshra.s32 %v631, 16
      %v634 = vcvt.s32.f32 %v632
      %v635 = vcvt.s32.f32 %v633
      %636 = vmin.xlane.f32.xlu0 %v635
      %v637 = vpop.xlane.xlu0 %636
      %vm638 = vcmp.eq.f32.partialorder %v635, %v637
      %v639 = vsel %vm638, %v634, inf
      %640 = vmin.xlane.f32.xlu0 %v639
      %v641 = vpop.xlane.xlu0 %640
      %v642 = vcvt.f32.s32 %v641
      %v643 = vcvt.f32.s32 %v637
      %v644 = vshll.u32 %v643, 16
      %v645 = vadd.s32 %v644, %v642
      %v646 = vsel %vm307, %v628, 2147483647
      %v647 = vand.u32 %v646, 65535
      %v648 = vshra.s32 %v646, 16
      %v649 = vcvt.s32.f32 %v647
      %v650 = vcvt.s32.f32 %v648
      %651 = vmin.xlane.f32.xlu0 %v650
      %v652 = vpop.xlane.xlu0 %651
      %vm653 = vcmp.eq.f32.partialorder %v650, %v652
      %v654 = vsel %vm653, %v649, inf
      %655 = vmin.xlane.f32.xlu0 %v654
      %v656 = vpop.xlane.xlu0 %655
      %v657 = vcvt.f32.s32 %v656
      %v658 = vcvt.f32.s32 %v652
      %v659 = vshll.u32 %v658, 16
      %v660 = vadd.s32 %v659, %v657
      %v661 = vsel %vm307, %v629, 2147483647
      %v662 = vand.u32 %v661, 65535
      %v663 = vshra.s32 %v661, 16
      %v664 = vcvt.s32.f32 %v662
      %v665 = vcvt.s32.f32 %v663
      %666 = vmin.xlane.f32.xlu0 %v665
      %v667 = vpop.xlane.xlu0 %666
      %vm668 = vcmp.eq.f32.partialorder %v665, %v667
      %v669 = vsel %vm668, %v664, inf
      %670 = vmin.xlane.f32.xlu0 %v669
      %v671 = vpop.xlane.xlu0 %670
      %v672 = vcvt.f32.s32 %v671
      %v673 = vcvt.f32.s32 %v667
      %v674 = vshll.u32 %v673, 16
      %v675 = vadd.s32 %v674, %v672
      %v676 = vsel %vm307, %v630, 2147483647
      %v677 = vand.u32 %v676, 65535
      %v678 = vshra.s32 %v676, 16
      %v679 = vcvt.s32.f32 %v677
      %v680 = vcvt.s32.f32 %v678
      %681 = vmin.xlane.f32.xlu0 %v680
      %v682 = vpop.xlane.xlu0 %681
      %vm683 = vcmp.eq.f32.partialorder %v680, %v682
      %v684 = vsel %vm683, %v679, inf
      %685 = vmin.xlane.f32.xlu0 %v684
      %v686 = vpop.xlane.xlu0 %685
      %v687 = vcvt.f32.s32 %v686
      %v688 = vcvt.f32.s32 %v682
      %v689 = vshll.u32 %v688, 16
      %v690 = vadd.s32 %v689, %v687
      %vm691 = vcmp.lt.s32.totalorder %v645, 31
      %v692 = vsel %vm691, %v645, 31
      %vm693 = vcmp.lt.s32.totalorder %v660, 31
      %v694 = vsel %vm693, %v660, 31
      %vm695 = vcmp.lt.s32.totalorder %v675, 31
      %v696 = vsel %vm695, %v675, 31
      %vm697 = vcmp.lt.s32.totalorder %v690, 31
      %v698 = vsel %vm697, %v690, 31
      %vm699 = vcmp.eq.s32.totalorder %v306, 3
      %v700 = vsel %vm699, %v692, %v599
      %v701 = vsel %vm699, %v694, %v600
      %v702 = vsel %vm699, %v696, %v601
      %v703 = vsel %vm699, %v698, %v602
      %vm704 = vcmask 31744
      %705 = vst.msk [vmem:[%s198] sm:$0xff] %vm704, %v700
      %706 = vst.msk [vmem:[%s198 + $0x8] sm:$0xff] %vm704, %v701
      %707 = vst.msk [vmem:[%s198 + $0x10] sm:$0xff] %vm704, %v702
      %708 = vst.msk [vmem:[%s198 + $0x18] sm:$0xff] %vm704, %v703
      %s709 = smul.u32 4, %s18
      %p710 = scmp.lt.s32.totalorder %s17, 1
      %s711 = scalar_select %p710, %s17, 1
      %p712 = scmp.lt.s32.totalorder %s709, 3
      %s713 = scalar_select %p712, %s709, 3
      %s714 = smul.addr %s711, 4
      %s715 = sadd.s32 %s713, %s714
      %s716 = smul.addr %s715, 8
      %s717 = scalar_lea.vmem %s2, %s716
      // Predicated region
      $region29: #{tpu_custom_call.1} parent=27 // pred_check
        %p718 = pneg %p99
      $region30: #{tpu_custom_call.1} parent=27 // pred_check_branch
        %720 = sbr.rel (%p718) target = $region32
      $region31: #{tpu_custom_call.1} parent=27 // pred_region
        %s721 = smul.u32 4, %s18
      $region32: #{tpu_custom_call.1} parent=27 // pred_fallthru
        _
    $region28: #{tpu_custom_call.1} parent=5 // pred_fallthru
      _
    %p722 = scmp.le.s32.totalorder 2, %s8
    // Predicated region
    $region33: #{tpu_custom_call.1} parent=5 // pred_check
      %p723 = pneg %p722
    $region34: #{tpu_custom_call.1} parent=5 // pred_check_branch
      %725 = sbr.rel (%p723) target = $region36
    $region35: #{tpu_custom_call.1} parent=5 // pred_region
      %s726 = ssub.s32 %s8, 2
      // Predicated region
      $region37: #{tpu_custom_call.1} parent=35 // pred_check
        %p727 = pneg %p105
      $region38: #{tpu_custom_call.1} parent=35 // pred_check_branch
        %729 = sbr.rel (%p727) target = $region40
      $region39: #{tpu_custom_call.1} parent=35 // pred_region
        %s730 = smul.u32 4, %s20
        %p731 = scmp.lt.s32.totalorder %s19, 1
        %s732 = scalar_select %p731, %s19, 1
        %p733 = scmp.lt.s32.totalorder %s730, 3
        %s734 = scalar_select %p733, %s730, 3
        %s735 = smul.addr %s732, 4
        %s736 = sadd.s32 %s734, %s735
        %s737 = smul.addr %s736, 8
        %s738 = scalar_lea.vmem %s2, %s737
      $region40: #{tpu_custom_call.1} parent=35 // pred_fallthru
        _
    $region36: #{tpu_custom_call.1} parent=5 // pred_fallthru
      _
  $region6: #{tpu_custom_call.1} parent=0 // loop_footer
    %s12 = sadd.s32 1, %s8
  $region7: #{tpu_custom_call.1} parent=0 // loop_footer_branch
    %7 = sbr.rel target = $region3
  $region8: #{tpu_custom_call.1} parent=0 // loop_exit
    _

</llo_original>
